<compile_context>
chip_gen: v6e
topology: v6e:2x2x1
jax: 0.10.0
libtpu: 0.0.40
codegen_flags: <defaults>
</compile_context>

<pallas_src>
import math

import jax
import jax.numpy as jnp
import numpy as np
from jax.experimental import pallas as pl
from jax.experimental.pallas import tpu as pltpu

MAX_RST_INDEX = 62
MAX_RST_LEVEL = 12
RST_ENC_NDIM = 768
INIT_VAL = 0.025
STD = 0.02
# (x - 1) // 2 at least halves any non-negative value, so 26 iterations bring
# any int32 below 62; extra iterations are no-ops (the where only touches
# out-of-range entries), equivalent to the data-dependent while loop.
CLAMP_ITERS = 26


def _round_up(x, m):
    return ((x + m - 1) // m) * m


def _cdiv(a, b):
    return (a + b - 1) // b


# ---------------------------------------------------------------------------
# deterministic parameter construction (mirrors EmbeddingRstPos.__init__)
# ---------------------------------------------------------------------------
def _left_right_seq_from_root(pos: int):
    seq = []
    while pos > 0:
        seq = (["R"] if pos % 2 == 0 else ["L"]) + seq
        pos = (pos - 1) // 2
    return seq


def make_fixed_rst_encoding_table(max_rst_index=MAX_RST_INDEX,
                                  max_rst_level=MAX_RST_LEVEL,
                                  init_val=INIT_VAL):
    w = np.zeros((max_rst_index, max_rst_level), dtype=np.float32)
    dir_val = {"L": -init_val, "R": init_val}
    for idx in range(max_rst_index):
        for j, d in enumerate(_left_right_seq_from_root(idx)):
            w[idx, j] = dir_val[d]
    return jnp.asarray(w)


def make_ffd_params(key, in_features=MAX_RST_LEVEL, out_features=RST_ENC_NDIM,
                    std=STD):
    kw, kb = jax.random.split(key)
    # weight ~ N(0, std) as in the module; bias ~ U(-1/sqrt(in), 1/sqrt(in))
    # (torch.nn.Linear default bias init).
    w = jax.random.normal(kw, (out_features, in_features), jnp.float32) * std
    bound = 1.0 / math.sqrt(in_features)
    b = jax.random.uniform(kb, (out_features,), jnp.float32, -bound, bound)
    return w, b


def _exact_gelu(y):
    # exact erf gelu (torch.nn.functional.gelu default)
    return 0.5 * y * (1.0 + jax.lax.erf(y * (1.0 / math.sqrt(2.0))))


# ---------------------------------------------------------------------------
# Pallas kernel: pure one-hot lookup into the pre-fused gelu(table@W.T+b) slab
# ---------------------------------------------------------------------------
def _rst_lookup_kernel(idx_ref, tbl_ref, o_ref):
    tn = idx_ref.shape[0]              # row tile (tokens)
    v = tbl_ref.shape[0]               # padded vocab (64)

    idx = idx_ref[...]                 # (tn, 1) int32, already clamped to [0, 62)
    iota = jax.lax.broadcasted_iota(jnp.int32, (tn, v), 1)
    onehot = (idx == iota).astype(jnp.float32)                    # (tn, v)
    # single MXU matmul == exact row gather of the fused table
    o_ref[...] = jnp.dot(onehot, tbl_ref[...],
                         preferred_element_type=jnp.float32)      # (tn, 768)


def embedding_rst_pos_forward(x, table, w, b, *,
                              max_rst_index=MAX_RST_INDEX, row_tile=2048):
    """x: integer array of any shape -> float32 array of shape x.shape + (768,)."""
    if x.size == 0:
        return x  # matches the torch module (returns input unchanged)

    orig_shape = x.shape
    d = w.shape[0]                      # 768

    # ---- parameter folding: gelu(table @ W.T + b) over the 62 distinct rows
    fused = _exact_gelu(
        jnp.dot(table.astype(jnp.float32),
                jnp.asarray(w, jnp.float32).T,
                precision=jax.lax.Precision.HIGHEST)
        + jnp.asarray(b, jnp.float32)[None, :])                   # (62, 768)
    v_pad = _round_up(fused.shape[0], 8)                          # -> 64
    fused = jnp.pad(fused, ((0, v_pad - fused.shape[0]), (0, 0)))  # rows never selected

    # ---- tree-parent clamp, lane-dense in the wrapper; arithmetic shift is
    # exact here because the branch only applies to idx >= max_rst_index > 0.
    # TODO(synk): negative indices produce a zero output row instead of raising
    # like torch.nn.Embedding.
    idx = x.reshape(-1).astype(jnp.int32)
    for _ in range(CLAMP_ITERS):
        idx = jnp.where(idx >= max_rst_index, (idx - 1) >> 1, idx)

    n = idx.shape[0]
    n_out = _round_up(n, 8)             # minimal sublane alignment only

    # ---- tile sizing: >= 2 grid steps once n_out >= 512 so ("parallel",)
    # actually spans v7x's two TensorCores; otherwise one tile covers it all.
    if n_out >= 512:
        eff_tile = min(row_tile, _round_up(_cdiv(n_out, 2), 8))
    else:
        eff_tile = n_out
    grid_steps = _cdiv(n_out, eff_tile)

    # Pad only the cheap (4 B/token) index vector to full tiles so every idx
    # block is in bounds; the (n_out, 768) output stays ragged and Pallas masks
    # the partial last block on writeback (no full-slab slice/copy afterwards).
    n_idx = grid_steps * eff_tile
    idx = jnp.pad(idx, (0, n_idx - n)).reshape(n_idx, 1)

    cost = pl.CostEstimate(
        flops=2 * n_idx * v_pad * d,
        transcendentals=0,
        bytes_accessed=n_out * d * 4 + n_idx * 4 + v_pad * d * 4,
    )

    out = pl.pallas_call(
        _rst_lookup_kernel,
        out_shape=jax.ShapeDtypeStruct((n_out, d), jnp.float32),
        grid=(grid_steps,),
        in_specs=[
            pl.BlockSpec((eff_tile, 1), lambda i: (i, 0)),   # token indices
            pl.BlockSpec((v_pad, d), lambda i: (0, 0)),      # fused 64x768 table
        ],
        out_specs=pl.BlockSpec((eff_tile, d), lambda i: (i, 0)),
        compiler_params=pltpu.CompilerParams(
            dimension_semantics=("parallel",),
            vmem_limit_bytes=32 * 1024 * 1024),
        cost_estimate=cost,
    )(idx, fused)

    if n_out != n:                      # only when n is not a multiple of 8
        out = out[:n]
    return out.reshape(orig_shape + (d,))


# ---------------------------------------------------------------------------
# pure-JAX reference (for correctness check)
# ---------------------------------------------------------------------------
def reference_forward(x, table, w, b, max_rst_index=MAX_RST_INDEX):
    xc = x.astype(jnp.int32)
    for _ in range(CLAMP_ITERS):
        xc = jnp.where(xc >= max_rst_index, (xc - 1) // 2, xc)
    emb = table[xc]                                   # gather
    y = jnp.dot(emb, jnp.asarray(w, jnp.float32).T,
                precision=jax.lax.Precision.HIGHEST) + b
    return _exact_gelu(y)


if __name__ == "__main__":
    key = jax.random.PRNGKey(0)
    k_x, k_x2, k_x3, k_ffd = jax.random.split(key, 4)

    # deterministic parameters
    table = make_fixed_rst_encoding_table(MAX_RST_INDEX, MAX_RST_LEVEL, INIT_VAL)
    w, b = make_ffd_params(k_ffd, MAX_RST_LEVEL, RST_ENC_NDIM, STD)

    # small example input: batch=2, seq=8 integer rst positions, some of which
    # exceed max_rst_index to exercise the clamp loop
    x = jax.random.randint(k_x, (2, 8), 0, 200, dtype=jnp.int32)
    out = jax.block_until_ready(embedding_rst_pos_forward(x, table, w, b))
    ref = jax.block_until_ready(reference_forward(x, table, w, b))
    assert out.shape == (2, 8, RST_ENC_NDIM), out.shape
    assert out.dtype == jnp.float32
    np.testing.assert_allclose(np.asarray(out), np.asarray(ref),
                               rtol=1e-5, atol=1e-5)

    # larger case: 2-step grid, tile-aligned rows
    x2 = jax.random.randint(k_x2, (4, 300), 0, 100000, dtype=jnp.int32)
    out2 = jax.block_until_ready(embedding_rst_pos_forward(x2, table, w, b))
    ref2 = jax.block_until_ready(reference_forward(x2, table, w, b))
    assert out2.shape == (4, 300, RST_ENC_NDIM), out2.shape
    np.testing.assert_allclose(np.asarray(out2), np.asarray(ref2),
                               rtol=1e-5, atol=1e-5)

    # ragged case: n = 999 -> padded to 1000 rows, 2 grid steps with a masked
    # partial last output block, exercises the out[:n] path
    x3 = jax.random.randint(k_x3, (3, 333), 0, 5000, dtype=jnp.int32)
    out3 = jax.block_until_ready(embedding_rst_pos_forward(x3, table, w, b))
    ref3 = jax.block_until_ready(reference_forward(x3, table, w, b))
    assert out3.shape == (3, 333, RST_ENC_NDIM), out3.shape
    np.testing.assert_allclose(np.asarray(out3), np.asarray(ref3),
                               rtol=1e-5, atol=1e-5)

    print("KERNEL_OK")
</pallas_src>

<mosaic_0001>
module attributes {stable_mosaic.version = 11 : i64} {
  func.func @_rst_lookup_kernel(%arg0: i32, %arg1: memref<16x1xi32, #tpu.memory_space<vmem>>, %arg2: memref<64x768xf32, #tpu.memory_space<vmem>>, %arg3: memref<16x768xf32, #tpu.memory_space<vmem>>) attributes {dimension_semantics = [#tpu.dimension_semantics<parallel>], iteration_bounds = array<i64: 1>, scalar_prefetch = 0 : i64, scratch_operands = 0 : i64, tpu.core_type = #tpu.core_type<tc>, window_params = [{transform_indices = @transform_0, window_bounds = array<i64: 16, 1>}, {pipeline_mode = #tpu.pipeline_mode<synchronous>, transform_indices = @transform_1, window_bounds = array<i64: 64, 768>}, {transform_indices = @transform_2, window_bounds = array<i64: 16, 768>}]} {
    %c0 = arith.constant 0 : index
    %c0_0 = arith.constant 0 : index
    %0 = vector.load %arg1[%c0, %c0_0] : memref<16x1xi32, #tpu.memory_space<vmem>>, vector<16x1xi32>
    %1 = tpu.iota {dimensions = array<i32: 1>} : vector<16x64xi32>
    %2 = vector.broadcast %0 : vector<16x1xi32> to vector<16x64xi32>
    %3 = arith.cmpi eq, %2, %1 : vector<16x64xi32>
    %4 = arith.extui %3 : vector<16x64xi1> to vector<16x64xi32>
    %5 = arith.sitofp %4 : vector<16x64xi32> to vector<16x64xf32>
    %c0_1 = arith.constant 0 : index
    %c0_2 = arith.constant 0 : index
    %6 = vector.load %arg2[%c0_1, %c0_2] : memref<64x768xf32, #tpu.memory_space<vmem>>, vector<64x768xf32>
    %cst = arith.constant dense<0.000000e+00> : vector<16x768xf32>
    %7 = tpu.matmul %5, %6, %cst {dimension_numbers = #tpu.dot_dimension_numbers<[1], [0], [0], [1], [0, 0, 1, 1], [], []>} : vector<16x64xf32>, vector<64x768xf32>, vector<16x768xf32> -> vector<16x768xf32>
    %c0_3 = arith.constant 0 : index
    %c0_4 = arith.constant 0 : index
    %8 = vector.load %arg3[%c0_3, %c0_4] : memref<16x768xf32, #tpu.memory_space<vmem>>, vector<16x768xf32>
    tpu.vector_store %arg3[%c0_3, %c0_4], %7 {strides = array<i32>} : memref<16x768xf32, #tpu.memory_space<vmem>>, vector<16x768xf32>,
    return
  }
  func.func @transform_0(%arg0: i32) -> (i32, i32) {
    %c0_i32 = arith.constant 0 : i32
    %c0_i32_0 = arith.constant 0 : i32
    return %arg0, %c0_i32 : i32, i32
  }
  func.func @transform_1(%arg0: i32) -> (i32, i32) {
    %c0_i32 = arith.constant 0 : i32
    %c0_i32_0 = arith.constant 0 : i32
    %c0_i32_1 = arith.constant 0 : i32
    return %c0_i32, %c0_i32_0 : i32, i32
  }
  func.func @transform_2(%arg0: i32) -> (i32, i32) {
    %c0_i32 = arith.constant 0 : i32
    %c0_i32_0 = arith.constant 0 : i32
    return %arg0, %c0_i32 : i32, i32
  }
}

</mosaic_0001>

<llo_original>
// kernel: tpu_custom_call.1
$region0: #{tpu_custom_call.1}
  #allocation0 [shape = 'u32[]', space=smem, size = 0x4, offset = 0x4, fixed_abs, tag = 'smem constant byte address 0x4 - core index']
  #allocation1 [shape = 'u32[144,128]{1,0:T(1,128)}', space=vmem, size = 0x12000, scoped, tag = 'internal scratch']
  %s0 = inlined_call_operand.vmem [shape: s32[16,1], index: 0, kind: input, shape index: {}]
  %s1 = inlined_call_operand.hbm [shape: f32[64,768], index: 1, kind: input, shape index: {}]
  %s2 = inlined_call_operand.hbm [shape: f32[16,768], index: 2, kind: output, shape index: {}]
  %s3 = sld [smem:[#allocation0]]
  $region22: #{tpu_custom_call.1} parent=0
    _
  %s5 = ssub.s32 1, %s3
  %s6 = scalar_select 0, %s5, %s3
  $region1: #{tpu_custom_call.1} parent=0
    #allocation2 [shape = 'u8[196608]{0}', space=vmem, size = 0x30000, scoped, tag = 'input window, operand 1, single buffered']
    #allocation3 [shape = 's32[1]{0}', space=sflag, size = 0x4, scoped, tag = 'scoped memory for tpu_custom_call.1']
    #allocation4 [shape = 's32[1]{0}', space=sflag, size = 0x4, scoped, tag = 'scoped memory for tpu_custom_call.1']
    #allocation5 [shape = 'u8[49152]{0}', space=vmem, size = 0xc000, scoped, tag = 'output window, operand 0, single buffered']
    %7 = vsyncpa [#allocation3], 0
    %8 = vsyncpa [#allocation4], 0
    // Predicated region
    $region2: #{tpu_custom_call.1} parent=1 // pred_check
      _
    $region3: #{tpu_custom_call.1} parent=1 // pred_check_branch
      %10 = sbr.rel (0) target = $region5
    $region4: #{tpu_custom_call.1} parent=1 // pred_region
      _
    $region5: #{tpu_custom_call.1} parent=1 // pred_fallthru
      _
    // Predicated region
    $region6: #{tpu_custom_call.1} parent=1 // pred_check
      _
    $region7: #{tpu_custom_call.1} parent=1 // pred_check_branch
      %12 = sbr.rel (0) target = $region9
    $region8: #{tpu_custom_call.1} parent=1 // pred_region
      %s14 = ssub.s32 6144, 6144
      %15 = vsyncadd [#allocation3], %s14
      %s16 = sshll.u32 [#allocation2], 4
      %s17 = int_to_ptr.vmem [resolvable:$true] %s16
      %22 = dma.hbm_to_vmem [thread:$0]  %s1, 6144, %s17, [#allocation3], 768, 768, 48
    $region9: #{tpu_custom_call.1} parent=1 // pred_fallthru
      _
    // Predicated region
    $region10: #{tpu_custom_call.1} parent=1 // pred_check
      _
    $region11: #{tpu_custom_call.1} parent=1 // pred_check_branch
      %24 = sbr.rel (0) target = $region13
    $region12: #{tpu_custom_call.1} parent=1 // pred_region
      %25 = dma.done [#allocation3], 6144
    $region13: #{tpu_custom_call.1} parent=1 // pred_fallthru
      _
    %v26 = vld [vmem:[%s0] sm:$0xff]
    %v27 = vld [vmem:[%s0 + $0x8] sm:$0xff]
    %v28 = vlaneseq
    %v29 = vand.u32 %v28, 127
    %30 = vset.pattern.permute.xlu0 0
    %31 = vperm.xlu0 %30, %v26
    %v32 = vpop.permute.xlu0 %31
    %33 = vset.pattern.permute.xlu0 0
    %34 = vperm.xlu0 %33, %v27
    %v35 = vpop.permute.xlu0 %34
    %vm36 = vcmp.eq.s32.totalorder %v32, %v29
    %vm37 = vcmp.eq.s32.totalorder %v35, %v29
    %v38 = vsel %vm36, 1, 0
    %v39 = vsel %vm37, 1, 0
    %v40 = vcvt.s32.f32 %v38
    %v41 = vcvt.s32.f32 %v39
    %v42 = vld [vmem:[#allocation2] sm:$0xff]
    %v43 = vld [vmem:[#allocation2 + $0x8] sm:$0xff]
    %v44 = vld [vmem:[#allocation2 + $0x10] sm:$0xff]
    %v45 = vld [vmem:[#allocation2 + $0x18] sm:$0xff]
    %v46 = vld [vmem:[#allocation2 + $0x20] sm:$0xff]
    %v47 = vld [vmem:[#allocation2 + $0x28] sm:$0xff]
    %v48 = vld [vmem:[#allocation2 + $0x30] sm:$0xff]
    %v49 = vld [vmem:[#allocation2 + $0x38] sm:$0xff]
    %v50 = vld [vmem:[#allocation2 + $0x40] sm:$0xff]
    %v51 = vld [vmem:[#allocation2 + $0x48] sm:$0xff]
    %v52 = vld [vmem:[#allocation2 + $0x50] sm:$0xff]
    %v53 = vld [vmem:[#allocation2 + $0x58] sm:$0xff]
    %v54 = vld [vmem:[#allocation2 + $0x60] sm:$0xff]
    %v55 = vld [vmem:[#allocation2 + $0x68] sm:$0xff]
    %v56 = vld [vmem:[#allocation2 + $0x70] sm:$0xff]
    %v57 = vld [vmem:[#allocation2 + $0x78] sm:$0xff]
    %v58 = vld [vmem:[#allocation2 + $0x80] sm:$0xff]
    %v59 = vld [vmem:[#allocation2 + $0x88] sm:$0xff]
    %v60 = vld [vmem:[#allocation2 + $0x90] sm:$0xff]
    %v61 = vld [vmem:[#allocation2 + $0x98] sm:$0xff]
    %v62 = vld [vmem:[#allocation2 + $0xa0] sm:$0xff]
    %v63 = vld [vmem:[#allocation2 + $0xa8] sm:$0xff]
    %v64 = vld [vmem:[#allocation2 + $0xb0] sm:$0xff]
    %v65 = vld [vmem:[#allocation2 + $0xb8] sm:$0xff]
    %v66 = vld [vmem:[#allocation2 + $0xc0] sm:$0xff]
    %v67 = vld [vmem:[#allocation2 + $0xc8] sm:$0xff]
    %v68 = vld [vmem:[#allocation2 + $0xd0] sm:$0xff]
    %v69 = vld [vmem:[#allocation2 + $0xd8] sm:$0xff]
    %v70 = vld [vmem:[#allocation2 + $0xe0] sm:$0xff]
    %v71 = vld [vmem:[#allocation2 + $0xe8] sm:$0xff]
    %v72 = vld [vmem:[#allocation2 + $0xf0] sm:$0xff]
    %v73 = vld [vmem:[#allocation2 + $0xf8] sm:$0xff]
    %v74 = vld [vmem:[#allocation2 + $0x100] sm:$0xff]
    %v75 = vld [vmem:[#allocation2 + $0x108] sm:$0xff]
    %v76 = vld [vmem:[#allocation2 + $0x110] sm:$0xff]
    %v77 = vld [vmem:[#allocation2 + $0x118] sm:$0xff]
    %v78 = vld [vmem:[#allocation2 + $0x120] sm:$0xff]
    %v79 = vld [vmem:[#allocation2 + $0x128] sm:$0xff]
    %v80 = vld [vmem:[#allocation2 + $0x130] sm:$0xff]
    %v81 = vld [vmem:[#allocation2 + $0x138] sm:$0xff]
    %v82 = vld [vmem:[#allocation2 + $0x140] sm:$0xff]
    %v83 = vld [vmem:[#allocation2 + $0x148] sm:$0xff]
    %v84 = vld [vmem:[#allocation2 + $0x150] sm:$0xff]
    %v85 = vld [vmem:[#allocation2 + $0x158] sm:$0xff]
    %v86 = vld [vmem:[#allocation2 + $0x160] sm:$0xff]
    %v87 = vld [vmem:[#allocation2 + $0x168] sm:$0xff]
    %v88 = vld [vmem:[#allocation2 + $0x170] sm:$0xff]
    %v89 = vld [vmem:[#allocation2 + $0x178] sm:$0xff]
    %vm90 = vcmask 523264
    %v92 = vsel %vm90, %v40, 0
    %v95 = vsel %vm90, %v41, 0
    %97 = vmatprep.subr.mxu0 0.0
    %98 = vmatpush1.msra.mxu0 0.0
    %99 = vmatprep.subr.mxu0 0.0
    %100 = vmatpush1.msra.mxu0 0.0
    %101 = vmatprep.subr.mxu0 0.0
    %102 = vmatpush1.msra.mxu0 0.0
    %103 = vmatprep.subr.mxu0 0.0
    %104 = vmatpush1.msra.mxu0 0.0
    %105 = vmatprep.subr.mxu0 0.0
    %106 = vmatpush1.msra.mxu0 0.0
    %107 = vmatprep.subr.mxu0 0.0
    %108 = vmatpush1.msra.mxu0 0.0
    %109 = vmatprep.subr.mxu0 0.0
    %110 = vmatpush1.msra.mxu0 0.0
    %111 = vmatprep.subr.mxu0 0.0
    %112 = vmatpush1.msra.mxu0 0.0
    %113 = vmatprep.subr.mxu0 %v85
    %114 = vmatpush1.msra.mxu0 %v84
    %115 = vmatprep.subr.mxu0 %v79
    %116 = vmatpush1.msra.mxu0 %v78
    %117 = vmatprep.subr.mxu0 %v73
    %118 = vmatpush1.msra.mxu0 %v72
    %119 = vmatprep.subr.mxu0 %v67
    %120 = vmatpush1.msra.mxu0 %v66
    %121 = vmatprep.subr.mxu0 %v61
    %122 = vmatpush1.msra.mxu0 %v60
    %123 = vmatprep.subr.mxu0 %v55
    %124 = vmatpush1.msra.mxu0 %v54
    %125 = vmatprep.subr.mxu0 %v49
    %126 = vmatpush1.msra.mxu0 %v48
    %127 = vmatprep.subr.mxu0 %v43
    %128 = vmatpush1.msra.mxu0 %v42
    %129 = vmatprep.subr.mxu0 0.0
    %130 = vmatpush2.msra.mxu0 0.0
    %131 = vmatprep.subr.mxu0 0.0
    %132 = vmatpush2.msra.mxu0 0.0
    %133 = vmatprep.subr.mxu0 0.0
    %134 = vmatpush2.msra.mxu0 0.0
    %135 = vmatprep.subr.mxu0 0.0
    %136 = vmatpush2.msra.mxu0 0.0
    %137 = vmatprep.subr.mxu0 0.0
    %138 = vmatpush2.msra.mxu0 0.0
    %139 = vmatprep.subr.mxu0 0.0
    %140 = vmatpush2.msra.mxu0 0.0
    %141 = vmatprep.subr.mxu0 0.0
    %142 = vmatpush2.msra.mxu0 0.0
    %143 = vmatprep.subr.mxu0 0.0
    %144 = vmatpush2.msra.mxu0 0.0
    %145 = vmatprep.subr.mxu0 0.0
    %146 = vmatpush2.msra.mxu0 0.0
    %147 = vmatprep.subr.mxu0 0.0
    %148 = vmatpush2.msra.mxu0 0.0
    %149 = vmatprep.subr.mxu0 0.0
    %150 = vmatpush2.msra.mxu0 0.0
    %151 = vmatprep.subr.mxu0 0.0
    %152 = vmatpush2.msra.mxu0 0.0
    %153 = vmatprep.subr.mxu0 0.0
    %154 = vmatpush2.msra.mxu0 0.0
    %155 = vmatprep.subr.mxu0 0.0
    %156 = vmatpush2.msra.mxu0 0.0
    %157 = vmatprep.subr.mxu0 0.0
    %158 = vmatpush2.msra.mxu0 0.0
    %159 = vmatprep.subr.mxu0 0.0
    %160 = vmatpush2.msra.mxu0 0.0
    %161 = vmatprep.mubr.f32.mxu0 0.0
    %162 = vmatmul.mubr.f32.gmra.mxu0 %v92
    %v163 = vpop.f32.mrf.mxu0
    %v164 = vadd.f32 0.0, %v163
    %v165 = vpop.f32.mrf.mxu0
    %v166 = vadd.f32 0.0, %v165
    %167 = vmatprep.mubr.f32.mxu0 0.0
    %168 = vmatmul.mubr.f32.gmra.mxu0 %v95
    %v169 = vpop.f32.mrf.mxu0
    %v170 = vadd.f32 0.0, %v169
    %v171 = vpop.f32.mrf.mxu0
    %v172 = vadd.f32 0.0, %v171
    %173 = vdwg.mxu0
    %174 = vmatprep.subr.mxu0 0.0
    %175 = vmatpush1.msra.mxu0 0.0
    %176 = vmatprep.subr.mxu0 0.0
    %177 = vmatpush1.msra.mxu0 0.0
    %178 = vmatprep.subr.mxu0 0.0
    %179 = vmatpush1.msra.mxu0 0.0
    %180 = vmatprep.subr.mxu0 0.0
    %181 = vmatpush1.msra.mxu0 0.0
    %182 = vmatprep.subr.mxu0 0.0
    %183 = vmatpush1.msra.mxu0 0.0
    %184 = vmatprep.subr.mxu0 0.0
    %185 = vmatpush1.msra.mxu0 0.0
    %186 = vmatprep.subr.mxu0 0.0
    %187 = vmatpush1.msra.mxu0 0.0
    %188 = vmatprep.subr.mxu0 0.0
    %189 = vmatpush1.msra.mxu0 0.0
    %190 = vmatprep.subr.mxu0 %v87
    %191 = vmatpush1.msra.mxu0 %v86
    %192 = vmatprep.subr.mxu0 %v81
    %193 = vmatpush1.msra.mxu0 %v80
    %194 = vmatprep.subr.mxu0 %v75
    %195 = vmatpush1.msra.mxu0 %v74
    %196 = vmatprep.subr.mxu0 %v69
    %197 = vmatpush1.msra.mxu0 %v68
    %198 = vmatprep.subr.mxu0 %v63
    %199 = vmatpush1.msra.mxu0 %v62
    %200 = vmatprep.subr.mxu0 %v57
    %201 = vmatpush1.msra.mxu0 %v56
    %202 = vmatprep.subr.mxu0 %v51
    %203 = vmatpush1.msra.mxu0 %v50
    %204 = vmatprep.subr.mxu0 %v45
    %205 = vmatpush1.msra.mxu0 %v44
    %206 = vmatprep.subr.mxu0 0.0
    %207 = vmatpush2.msra.mxu0 0.0
    %208 = vmatprep.subr.mxu0 0.0
    %209 = vmatpush2.msra.mxu0 0.0
    %210 = vmatprep.subr.mxu0 0.0
    %211 = vmatpush2.msra.mxu0 0.0
    %212 = vmatprep.subr.mxu0 0.0
    %213 = vmatpush2.msra.mxu0 0.0
    %214 = vmatprep.subr.mxu0 0.0
    %215 = vmatpush2.msra.mxu0 0.0
    %216 = vmatprep.subr.mxu0 0.0
    %217 = vmatpush2.msra.mxu0 0.0
    %218 = vmatprep.subr.mxu0 0.0
    %219 = vmatpush2.msra.mxu0 0.0
    %220 = vmatprep.subr.mxu0 0.0
    %221 = vmatpush2.msra.mxu0 0.0
    %222 = vmatprep.subr.mxu0 0.0
    %223 = vmatpush2.msra.mxu0 0.0
    %224 = vmatprep.subr.mxu0 0.0
    %225 = vmatpush2.msra.mxu0 0.0
    %226 = vmatprep.subr.mxu0 0.0
    %227 = vmatpush2.msra.mxu0 0.0
    %228 = vmatprep.subr.mxu0 0.0
    %229 = vmatpush2.msra.mxu0 0.0
    %230 = vmatprep.subr.mxu0 0.0
    %231 = vmatpush2.msra.mxu0 0.0
    %232 = vmatprep.subr.mxu0 0.0
    %233 = vmatpush2.msra.mxu0 0.0
    %234 = vmatprep.subr.mxu0 0.0
    %235 = vmatpush2.msra.mxu0 0.0
    %236 = vmatprep.subr.mxu0 0.0
    %237 = vmatpush2.msra.mxu0 0.0
    %238 = vmatprep.mubr.f32.mxu0 0.0
    %239 = vmatmul.mubr.f32.gmra.mxu0 %v92
    %v240 = vpop.f32.mrf.mxu0
    %v241 = vadd.f32 0.0, %v240
    %v242 = vpop.f32.mrf.mxu0
    %v243 = vadd.f32 0.0, %v242
    %244 = vmatprep.mubr.f32.mxu0 0.0
    %245 = vmatmul.mubr.f32.gmra.mxu0 %v95
    %v246 = vpop.f32.mrf.mxu0
    %v247 = vadd.f32 0.0, %v246
    %v248 = vpop.f32.mrf.mxu0
    %v249 = vadd.f32 0.0, %v248
    %250 = vdwg.mxu0
    %251 = vmatprep.subr.mxu0 0.0
    %252 = vmatpush1.msra.mxu0 0.0
    %253 = vmatprep.subr.mxu0 0.0
    %254 = vmatpush1.msra.mxu0 0.0
    %255 = vmatprep.subr.mxu0 0.0
    %256 = vmatpush1.msra.mxu0 0.0
    %257 = vmatprep.subr.mxu0 0.0
    %258 = vmatpush1.msra.mxu0 0.0
    %259 = vmatprep.subr.mxu0 0.0
    %260 = vmatpush1.msra.mxu0 0.0
    %261 = vmatprep.subr.mxu0 0.0
    %262 = vmatpush1.msra.mxu0 0.0
    %263 = vmatprep.subr.mxu0 0.0
    %264 = vmatpush1.msra.mxu0 0.0
    %265 = vmatprep.subr.mxu0 0.0
    %266 = vmatpush1.msra.mxu0 0.0
    %267 = vmatprep.subr.mxu0 %v89
    %268 = vmatpush1.msra.mxu0 %v88
    %269 = vmatprep.subr.mxu0 %v83
    %270 = vmatpush1.msra.mxu0 %v82
    %271 = vmatprep.subr.mxu0 %v77
    %272 = vmatpush1.msra.mxu0 %v76
    %273 = vmatprep.subr.mxu0 %v71
    %274 = vmatpush1.msra.mxu0 %v70
    %275 = vmatprep.subr.mxu0 %v65
    %276 = vmatpush1.msra.mxu0 %v64
    %277 = vmatprep.subr.mxu0 %v59
    %278 = vmatpush1.msra.mxu0 %v58
    %279 = vmatprep.subr.mxu0 %v53
    %280 = vmatpush1.msra.mxu0 %v52
    %281 = vmatprep.subr.mxu0 %v47
    %282 = vmatpush1.msra.mxu0 %v46
    %283 = vmatprep.subr.mxu0 0.0
    %284 = vmatpush2.msra.mxu0 0.0
    %285 = vmatprep.subr.mxu0 0.0
    %286 = vmatpush2.msra.mxu0 0.0
    %287 = vmatprep.subr.mxu0 0.0
    %288 = vmatpush2.msra.mxu0 0.0
    %289 = vmatprep.subr.mxu0 0.0
    %290 = vmatpush2.msra.mxu0 0.0
    %291 = vmatprep.subr.mxu0 0.0
    %292 = vmatpush2.msra.mxu0 0.0
    %293 = vmatprep.subr.mxu0 0.0
    %294 = vmatpush2.msra.mxu0 0.0
    %295 = vmatprep.subr.mxu0 0.0
    %296 = vmatpush2.msra.mxu0 0.0
    %297 = vmatprep.subr.mxu0 0.0
    %298 = vmatpush2.msra.mxu0 0.0
    %299 = vmatprep.subr.mxu0 0.0
    %300 = vmatpush2.msra.mxu0 0.0
    %301 = vmatprep.subr.mxu0 0.0
    %302 = vmatpush2.msra.mxu0 0.0
    %303 = vmatprep.subr.mxu0 0.0
    %304 = vmatpush2.msra.mxu0 0.0
    %305 = vmatprep.subr.mxu0 0.0
    %306 = vmatpush2.msra.mxu0 0.0
    %307 = vmatprep.subr.mxu0 0.0
    %308 = vmatpush2.msra.mxu0 0.0
    %309 = vmatprep.subr.mxu0 0.0
    %310 = vmatpush2.msra.mxu0 0.0
    %311 = vmatprep.subr.mxu0 0.0
    %312 = vmatpush2.msra.mxu0 0.0
    %313 = vmatprep.subr.mxu0 0.0
    %314 = vmatpush2.msra.mxu0 0.0
    %315 = vmatprep.mubr.f32.mxu0 0.0
    %316 = vmatmul.mubr.f32.gmra.mxu0 %v92
    %v317 = vpop.f32.mrf.mxu0
    %v318 = vadd.f32 0.0, %v317
    %v319 = vpop.f32.mrf.mxu0
    %v320 = vadd.f32 0.0, %v319
    %321 = vmatprep.mubr.f32.mxu0 0.0
    %322 = vmatmul.mubr.f32.gmra.mxu0 %v95
    %v323 = vpop.f32.mrf.mxu0
    %v324 = vadd.f32 0.0, %v323
    %v325 = vpop.f32.mrf.mxu0
    %v326 = vadd.f32 0.0, %v325
    %327 = vdwg.mxu0
    %328 = vst [vmem:[#allocation5] sm:$0xff] %v164
    %329 = vst [vmem:[#allocation5 + $0x8] sm:$0xff] %v166
    %330 = vst [vmem:[#allocation5 + $0x10] sm:$0xff] %v241
    %331 = vst [vmem:[#allocation5 + $0x18] sm:$0xff] %v243
    %332 = vst [vmem:[#allocation5 + $0x20] sm:$0xff] %v318
    %333 = vst [vmem:[#allocation5 + $0x28] sm:$0xff] %v320
    %334 = vst [vmem:[#allocation5 + $0x30] sm:$0xff] %v170
    %335 = vst [vmem:[#allocation5 + $0x38] sm:$0xff] %v172
    %336 = vst [vmem:[#allocation5 + $0x40] sm:$0xff] %v247
    %337 = vst [vmem:[#allocation5 + $0x48] sm:$0xff] %v249
    %338 = vst [vmem:[#allocation5 + $0x50] sm:$0xff] %v324
    %339 = vst [vmem:[#allocation5 + $0x58] sm:$0xff] %v326
    // Predicated region
    $region14: #{tpu_custom_call.1} parent=1 // pred_check
      _
    $region15: #{tpu_custom_call.1} parent=1 // pred_check_branch
      %341 = sbr.rel (0) target = $region17
    $region16: #{tpu_custom_call.1} parent=1 // pred_region
      %s343 = ssub.s32 1536, 1536
      %344 = vsyncadd [#allocation4], %s343
      %s345 = sshll.u32 [#allocation5], 4
      %s346 = int_to_ptr.vmem [resolvable:$true] %s345
      %351 = dma.vmem_to_hbm [thread:$0]  %s346, 1536, %s2, [#allocation4], 768, 768, 48
    $region17: #{tpu_custom_call.1} parent=1 // pred_fallthru
      _
    // Predicated region
    $region18: #{tpu_custom_call.1} parent=1 // pred_check
      _
    $region19: #{tpu_custom_call.1} parent=1 // pred_check_branch
      %353 = sbr.rel (0) target = $region21
    $region20: #{tpu_custom_call.1} parent=1 // pred_region
      %354 = dma.done [#allocation4], 1536
    $region21: #{tpu_custom_call.1} parent=1 // pred_fallthru
      _
    %355 = vsyncpa [#allocation3], 1
    %356 = vsyncpa [#allocation4], 1

</llo_original>
